<compile_context>
chip_gen: v5e
topology: v5e:2x2
jax: 0.10.0
libtpu: 0.0.40
codegen_flags: <defaults>
</compile_context>

<pallas_src>
from functools import partial

import jax
import jax.numpy as jnp
from jax.experimental import pallas as pl
from jax.experimental.pallas import tpu as pltpu

# ---------------- model hyperparameters (small, consistent with the module) ---
OB_DIM = 16         # hparams['ob_dim']
OUTPUT_SIZE = 8     # hparams['rnd_output_size']
N_LAYERS = 2        # hparams['rnd_n_layers']
SIZE = 32           # hparams['rnd_size']

N_MATS = N_LAYERS + 1   # number of Linear layers per MLP


# ---------------------------------- kernel -----------------------------------
def rnd_kernel(x_ref, *refs):
    """One batch tile of sqrt(mean((f_hat(x) - f(x))**2, feature_axis)).

    x_ref : (TB, ob_dim)   natural batch-major input tile (contiguous DMA).
    refs  : [W0, b0, W1, b1, ..., out_ref] where Wi are the FUSED
            (block-diagonal) weights in (out, in) layout, bi are (out, 1),
            and out_ref is the (1, TB) lane-dense output row.
    """
    out_ref = refs[-1]
    param_refs = refs[:-1]
    n_mats = len(param_refs) // 2

    x = x_ref[...]                                   # (TB, ob_dim), f32

    # Layer 0: fold the (TB, ob_dim) -> (ob_dim, TB) transpose into the MXU
    # matmul (dot(W0, x.T), q @ k.T style).  From here on activations are
    # feature-major: (features, TB), lane = example, fully lane-dense.
    h = jnp.dot(param_refs[0][...], x.T,
                preferred_element_type=jnp.float32) + param_refs[1][...]
    if n_mats > 1:
        h = jnp.tanh(h)

    for i in range(1, n_mats):
        w = param_refs[2 * i][...]                   # (out, in)
        b = param_refs[2 * i + 1][...]               # (out, 1)
        h = jnp.dot(w, h, preferred_element_type=jnp.float32) + b
        if i < n_mats - 1:
            h = jnp.tanh(h)

    # Fused output is [f_out ; f_hat_out] stacked along the feature (sublane)
    # axis.  Slice at the (8-aligned) midpoint and reduce over features.
    half = h.shape[0] // 2
    diff = h[half:, :] - h[:half, :]                 # (output_size, TB)
    mse = jnp.mean(diff * diff, axis=0, keepdims=True)   # (1, TB)
    out_ref[...] = jnp.sqrt(mse)                     # lane-dense store


# ------------------------ f / f_hat fusion (wrapper side) ---------------------
def fuse_params(f_params, g_params):
    """Fuse two MLPs (same architecture) into one block-diagonal MLP.

    Params are lists of (W, b) with W in PyTorch (out, in) layout, b (out, 1).
    Layer 0: weights stacked along out; hidden/final layers: block-diagonal.
    """
    fused = []
    for i, ((wf, bf), (wg, bg)) in enumerate(zip(f_params, g_params)):
        if i == 0:
            w = jnp.concatenate([wf, wg], axis=0)                    # (2*out, in)
        else:
            z_fg = jnp.zeros((wf.shape[0], wg.shape[1]), wf.dtype)
            z_gf = jnp.zeros((wg.shape[0], wf.shape[1]), wg.dtype)
            w = jnp.concatenate(
                [jnp.concatenate([wf, z_fg], axis=1),
                 jnp.concatenate([z_gf, wg], axis=1)], axis=0)       # block-diag
        b = jnp.concatenate([bf, bg], axis=0)                        # (2*out, 1)
        fused.append((w, b))
    return fused


def fuse_and_flatten(f_params, g_params):
    """Call ONCE per weight update (hoisted out of the per-forward path)."""
    flat = []
    for w, b in fuse_params(f_params, g_params):
        flat += [w, b]
    return tuple(flat)


# --------------------------------- wrapper ------------------------------------
def _pick_tile(n, batch_tile):
    """Lane dim multiple of 128; prefer >=2 grid steps so the 'parallel' grid
    axis can span both TensorCores on v7x."""
    tile = min(batch_tile, 128 * pl.cdiv(pl.cdiv(n, 2), 128))
    return max(128, tile)


@partial(jax.jit, static_argnames=("batch_tile", "vmem_limit_bytes"))
def rnd_forward(ob_no, fused_flat, *, batch_tile=8192,
                vmem_limit_bytes=32 * 1024 * 1024):
    """ob_no: (N, ob_dim) float32.  fused_flat: output of fuse_and_flatten.

    Returns (N,) float32 per-example RND prediction error.
    """
    n, ob_dim = ob_no.shape
    tile = _pick_tile(n, batch_tile)
    n_tiles = pl.cdiv(n, tile)
    x = ob_no.astype(jnp.float32)                    # no pad, no transpose

    in_specs = [pl.BlockSpec((tile, ob_dim), lambda i: (i, 0))]
    in_specs += [pl.BlockSpec(p.shape, lambda i: (0, 0)) for p in fused_flat]

    out = pl.pallas_call(
        rnd_kernel,
        out_shape=jax.ShapeDtypeStruct((1, n_tiles * tile), jnp.float32),
        grid_spec=pltpu.PrefetchScalarGridSpec(
            num_scalar_prefetch=0,
            grid=(n_tiles,),
            in_specs=in_specs,
            out_specs=pl.BlockSpec((1, tile), lambda i: (0, i)),
        ),
        compiler_params=pltpu.CompilerParams(
            dimension_semantics=("parallel",),
            vmem_limit_bytes=vmem_limit_bytes),
    )(x, *fused_flat)

    return out[0, :n]


# ------------------------- deterministic parameter init -----------------------
def build_mlp_params(key, input_size, output_size, n_layers, size, init):
    """Returns list of (W, b) with W shaped (out, in) (PyTorch layout), b (out, 1)."""
    dims = [input_size] + [size] * n_layers + [output_size]
    params = []
    for i in range(len(dims) - 1):
        key, kw, kb = jax.random.split(key, 3)
        if init == "uniform":        # init_method_1: uniform_() in [0, 1)
            w = jax.random.uniform(kw, (dims[i + 1], dims[i]), jnp.float32)
            b = jax.random.uniform(kb, (dims[i + 1], 1), jnp.float32)
        else:                        # init_method_2: normal_() standard normal
            w = jax.random.normal(kw, (dims[i + 1], dims[i]), jnp.float32)
            b = jax.random.normal(kb, (dims[i + 1], 1), jnp.float32)
        params.append((w, b))
    return params


def rnd_forward_ref(ob_no, f_params, g_params):
    """Pure-JAX reference of the PyTorch forward, for correctness checking."""
    def mlp(x, params):
        h = x
        for i, (w, b) in enumerate(params):
            h = h @ w.T + b[:, 0]
            if i < len(params) - 1:
                h = jnp.tanh(h)
        return h
    f_out = mlp(ob_no, f_params)
    g_out = mlp(ob_no, g_params)
    return jnp.sqrt(jnp.mean((g_out - f_out) ** 2, axis=1))


# ----------------------------------- main --------------------------------------
if __name__ == "__main__":
    key = jax.random.PRNGKey(0)
    k_f, k_g, k_x1, k_x2, k_x3 = jax.random.split(key, 5)

    f_params = build_mlp_params(k_f, OB_DIM, OUTPUT_SIZE, N_LAYERS, SIZE,
                                init="uniform")   # self.f     (init_method_1)
    g_params = build_mlp_params(k_g, OB_DIM, OUTPUT_SIZE, N_LAYERS, SIZE,
                                init="normal")    # self.f_hat (init_method_2)

    # Fuse once (hoisted out of the per-call path; redo only on weight update).
    fused_flat = fuse_and_flatten(f_params, g_params)

    # TODO(synk): update()/optimizer (Adam + backward on MSE) is training-side
    # and is not implemented here; only the forward pass is kernelized.

    tests = [
        (300, k_x1),      # ragged small batch: 2 tiles of 256, partial last block
        (2000, k_x2),     # 2 tiles of 1024, partial last block
        (20000, k_x3),    # multi-tile at the full 8192 batch tile
    ]
    for n, k in tests:
        ob = jax.random.normal(k, (n, OB_DIM), jnp.float32)
        err = jax.block_until_ready(rnd_forward(ob, fused_flat))
        ref = rnd_forward_ref(ob, f_params, g_params)
        assert err.shape == (n,)
        assert jnp.allclose(err, ref, atol=1e-4, rtol=1e-5), (n, err, ref)

    print("KERNEL_OK")
</pallas_src>

<mosaic_0001>
module attributes {stable_mosaic.version = 11 : i64} {
  func.func @rnd_kernel(%arg0: i32, %arg1: memref<256x16xf32, #tpu.memory_space<vmem>>, %arg2: memref<64x16xf32, #tpu.memory_space<vmem>>, %arg3: memref<64x1xf32, #tpu.memory_space<vmem>>, %arg4: memref<64x64xf32, #tpu.memory_space<vmem>>, %arg5: memref<64x1xf32, #tpu.memory_space<vmem>>, %arg6: memref<16x64xf32, #tpu.memory_space<vmem>>, %arg7: memref<16x1xf32, #tpu.memory_space<vmem>>, %arg8: memref<1x256xf32, #tpu.memory_space<vmem>>) attributes {dimension_semantics = [#tpu.dimension_semantics<parallel>], iteration_bounds = array<i64: 2>, scalar_prefetch = 0 : i64, scratch_operands = 0 : i64, tpu.core_type = #tpu.core_type<tc>, window_params = [{transform_indices = @transform_0, window_bounds = array<i64: 256, 16>}, {pipeline_mode = #tpu.pipeline_mode<synchronous>, transform_indices = @transform_1, window_bounds = array<i64: 64, 16>}, {pipeline_mode = #tpu.pipeline_mode<synchronous>, transform_indices = @transform_2, window_bounds = array<i64: 64, 1>}, {pipeline_mode = #tpu.pipeline_mode<synchronous>, transform_indices = @transform_3, window_bounds = array<i64: 64, 64>}, {pipeline_mode = #tpu.pipeline_mode<synchronous>, transform_indices = @transform_4, window_bounds = array<i64: 64, 1>}, {pipeline_mode = #tpu.pipeline_mode<synchronous>, transform_indices = @transform_5, window_bounds = array<i64: 16, 64>}, {pipeline_mode = #tpu.pipeline_mode<synchronous>, transform_indices = @transform_6, window_bounds = array<i64: 16, 1>}, {transform_indices = @transform_7, window_bounds = array<i64: 1, 256>}]} {
    %c0 = arith.constant 0 : index
    %c0_0 = arith.constant 0 : index
    %0 = vector.load %arg1[%c0, %c0_0] : memref<256x16xf32, #tpu.memory_space<vmem>>, vector<256x16xf32>
    %c0_1 = arith.constant 0 : index
    %c0_2 = arith.constant 0 : index
    %1 = vector.load %arg2[%c0_1, %c0_2] : memref<64x16xf32, #tpu.memory_space<vmem>>, vector<64x16xf32>
    %2 = tpu.transpose %0, [1, 0] : vector<256x16xf32> -> vector<16x256xf32>
    %cst = arith.constant dense<0.000000e+00> : vector<64x256xf32>
    %3 = tpu.matmul %1, %2, %cst {dimension_numbers = #tpu.dot_dimension_numbers<[1], [0], [0], [1], [0, 0, 1, 1], [], []>} : vector<64x16xf32>, vector<16x256xf32>, vector<64x256xf32> -> vector<64x256xf32>
    %c0_3 = arith.constant 0 : index
    %c0_4 = arith.constant 0 : index
    %4 = vector.load %arg3[%c0_3, %c0_4] : memref<64x1xf32, #tpu.memory_space<vmem>>, vector<64x1xf32>
    %5 = vector.broadcast %4 : vector<64x1xf32> to vector<64x256xf32>
    %6 = arith.addf %3, %5 : vector<64x256xf32>
    %7 = math.tanh %6 : vector<64x256xf32>
    %c0_5 = arith.constant 0 : index
    %c0_6 = arith.constant 0 : index
    %8 = vector.load %arg4[%c0_5, %c0_6] : memref<64x64xf32, #tpu.memory_space<vmem>>, vector<64x64xf32>
    %c0_7 = arith.constant 0 : index
    %c0_8 = arith.constant 0 : index
    %9 = vector.load %arg5[%c0_7, %c0_8] : memref<64x1xf32, #tpu.memory_space<vmem>>, vector<64x1xf32>
    %cst_9 = arith.constant dense<0.000000e+00> : vector<64x256xf32>
    %10 = tpu.matmul %8, %7, %cst_9 {dimension_numbers = #tpu.dot_dimension_numbers<[1], [0], [0], [1], [0, 0, 1, 1], [], []>} : vector<64x64xf32>, vector<64x256xf32>, vector<64x256xf32> -> vector<64x256xf32>
    %11 = vector.broadcast %9 : vector<64x1xf32> to vector<64x256xf32>
    %12 = arith.addf %10, %11 : vector<64x256xf32>
    %13 = math.tanh %12 : vector<64x256xf32>
    %c0_10 = arith.constant 0 : index
    %c0_11 = arith.constant 0 : index
    %14 = vector.load %arg6[%c0_10, %c0_11] : memref<16x64xf32, #tpu.memory_space<vmem>>, vector<16x64xf32>
    %c0_12 = arith.constant 0 : index
    %c0_13 = arith.constant 0 : index
    %15 = vector.load %arg7[%c0_12, %c0_13] : memref<16x1xf32, #tpu.memory_space<vmem>>, vector<16x1xf32>
    %cst_14 = arith.constant dense<0.000000e+00> : vector<16x256xf32>
    %16 = tpu.matmul %14, %13, %cst_14 {dimension_numbers = #tpu.dot_dimension_numbers<[1], [0], [0], [1], [0, 0, 1, 1], [], []>} : vector<16x64xf32>, vector<64x256xf32>, vector<16x256xf32> -> vector<16x256xf32>
    %17 = vector.broadcast %15 : vector<16x1xf32> to vector<16x256xf32>
    %18 = arith.addf %16, %17 : vector<16x256xf32>
    %19 = vector.extract_strided_slice %18 {offsets = [8, 0], sizes = [8, 256], strides = [1, 1]} : vector<16x256xf32> to vector<8x256xf32>
    %20 = vector.extract_strided_slice %18 {offsets = [0, 0], sizes = [8, 256], strides = [1, 1]} : vector<16x256xf32> to vector<8x256xf32>
    %21 = arith.subf %19, %20 : vector<8x256xf32>
    %22 = arith.mulf %21, %21 : vector<8x256xf32>
    %cst_15 = arith.constant dense<0.000000e+00> : vector<256xf32>
    %23 = vector.multi_reduction <add>, %22, %cst_15 [0] : vector<8x256xf32> to vector<256xf32>
    %24 = vector.shape_cast %23 : vector<256xf32> to vector<1x256xf32>
    %cst_16 = arith.constant 8.000000e+00 : f32
    %25 = vector.broadcast %cst_16 : f32 to vector<1x256xf32>
    %26 = arith.divf %24, %25 : vector<1x256xf32>
    %27 = math.sqrt %26 : vector<1x256xf32>
    %c0_17 = arith.constant 0 : index
    %c0_18 = arith.constant 0 : index
    %28 = vector.load %arg8[%c0_17, %c0_18] : memref<1x256xf32, #tpu.memory_space<vmem>>, vector<1x256xf32>
    tpu.vector_store %arg8[%c0_17, %c0_18], %27 {strides = array<i32>} : memref<1x256xf32, #tpu.memory_space<vmem>>, vector<1x256xf32>,
    return
  }
  func.func @transform_0(%arg0: i32) -> (i32, i32) {
    %c0_i32 = arith.constant 0 : i32
    %c0_i32_0 = arith.constant 0 : i32
    return %arg0, %c0_i32 : i32, i32
  }
  func.func @transform_1(%arg0: i32) -> (i32, i32) {
    %c0_i32 = arith.constant 0 : i32
    %c0_i32_0 = arith.constant 0 : i32
    %c0_i32_1 = arith.constant 0 : i32
    return %c0_i32, %c0_i32_0 : i32, i32
  }
  func.func @transform_2(%arg0: i32) -> (i32, i32) {
    %c0_i32 = arith.constant 0 : i32
    %c0_i32_0 = arith.constant 0 : i32
    %c0_i32_1 = arith.constant 0 : i32
    return %c0_i32, %c0_i32_0 : i32, i32
  }
  func.func @transform_3(%arg0: i32) -> (i32, i32) {
    %c0_i32 = arith.constant 0 : i32
    %c0_i32_0 = arith.constant 0 : i32
    %c0_i32_1 = arith.constant 0 : i32
    return %c0_i32, %c0_i32_0 : i32, i32
  }
  func.func @transform_4(%arg0: i32) -> (i32, i32) {
    %c0_i32 = arith.constant 0 : i32
    %c0_i32_0 = arith.constant 0 : i32
    %c0_i32_1 = arith.constant 0 : i32
    return %c0_i32, %c0_i32_0 : i32, i32
  }
  func.func @transform_5(%arg0: i32) -> (i32, i32) {
    %c0_i32 = arith.constant 0 : i32
    %c0_i32_0 = arith.constant 0 : i32
    %c0_i32_1 = arith.constant 0 : i32
    return %c0_i32, %c0_i32_0 : i32, i32
  }
  func.func @transform_6(%arg0: i32) -> (i32, i32) {
    %c0_i32 = arith.constant 0 : i32
    %c0_i32_0 = arith.constant 0 : i32
    %c0_i32_1 = arith.constant 0 : i32
    return %c0_i32, %c0_i32_0 : i32, i32
  }
  func.func @transform_7(%arg0: i32) -> (i32, i32) {
    %c0_i32 = arith.constant 0 : i32
    %c0_i32_0 = arith.constant 0 : i32
    return %c0_i32, %arg0 : i32, i32
  }
}

</mosaic_0001>

<llo_original>
// kernel: rnd_forward.1
$region0: #{rnd_forward.1}
  #allocation0 [shape = 'u32[]', space=smem, size = 0x4, offset = 0x4, fixed_abs, tag = 'smem constant byte address 0x4 - core index']
  #allocation1 [shape = 'u32[72,128]{1,0:T(1,128)}', space=vmem, size = 0x9000, scoped, tag = 'internal scratch']
  %s0 = inlined_call_operand.vmem [shape: f32[300,16], index: 0, kind: input, shape index: {}]
  %s1 = inlined_call_operand.vmem [shape: f32[64,16], index: 1, kind: input, shape index: {}]
  %s2 = inlined_call_operand.vmem [shape: f32[64,1], index: 2, kind: input, shape index: {}]
  %s3 = inlined_call_operand.vmem [shape: f32[64,64], index: 3, kind: input, shape index: {}]
  %s4 = inlined_call_operand.vmem [shape: f32[64,1], index: 4, kind: input, shape index: {}]
  %s5 = inlined_call_operand.vmem [shape: f32[16,64], index: 5, kind: input, shape index: {}]
  %s6 = inlined_call_operand.vmem [shape: f32[16,1], index: 6, kind: input, shape index: {}]
  %s7 = inlined_call_operand.vmem [shape: f32[1,512], index: 7, kind: output, shape index: {}]
  %s8 = sld [smem:[#allocation0]]
  $region61: #{rnd_forward.1} parent=0
    _
  %s10 = ssub.s32 1, %s8
  %s11 = scalar_select 0, %s10, %s8
  loop: start=0, step=1, limit=4
  $region2: #{rnd_forward.1} parent=0 // loop_pre_header
    _
  $region3: #{rnd_forward.1} parent=0 // loop_header
    %s13 = sphi 0, %s17
    %p14 = scmp.ge.s32.totalorder %s13, 4
    %s23 = sphi 0, %s25
    %s26 = sphi 0, %s23
    %s27 = sphi 0, %s26
    %s43 = sphi 0, %s27
    %s47 = sphi 0, %s47
    %s49 = sphi 0, %s47
    %s50 = sphi 0, %s49
    %s64 = sphi 0, %s50
    %s68 = sphi 0, %s68
    %s70 = sphi 0, %s68
    %s71 = sphi 0, %s70
    %s85 = sphi 0, %s71
    %s89 = sphi 0, %s89
    %s91 = sphi 0, %s89
    %s92 = sphi 0, %s91
    %s106 = sphi 0, %s92
    %s110 = sphi 0, %s110
    %s112 = sphi 0, %s110
    %s113 = sphi 0, %s112
    %s127 = sphi 0, %s113
    %s131 = sphi 0, %s131
    %s133 = sphi 0, %s131
    %s134 = sphi 0, %s133
    %s148 = sphi 0, %s134
    %s152 = sphi 0, %s152
    %s154 = sphi 0, %s152
    %s155 = sphi 0, %s154
    %s169 = sphi 0, %s155
    %s175 = sphi 0, %s177
    %s178 = sphi 0, %s175
    %s179 = sphi 0, %s178
    %s195 = sphi 0, %s179
  $region4: #{rnd_forward.1} parent=0 // loop_header_branch
    %16 = sbr.rel (%p14) target = $region8
  $region5: #{rnd_forward.1} parent=0 // loop_body
    %s18 = ssub.s32 %s13, 1
    %s19 = ssub.s32 %s13, 2
    %s20 = sadd.s32 %s13, 1
    %s21 = ssub.s32 %s13, %s20
    %p22 = scmp.eq.s32.totalorder %s21, 0
    %s24 = sadd.s32 %s23, 1
    %s25 = scalar_select %p22, %s23, %s24
    %p28 = pneg %p22
    %p29 = scmp.eq.s32.totalorder %s13, 1
    %p30 = por %p28, %p29
    %p31 = scmp.ne.s32.totalorder %s23, %s26
    %p32 = scmp.eq.s32.totalorder %s13, 0
    %p33 = por %p31, %p32
    %p34 = scmp.ne.s32.totalorder %s23, %s26
    %p35 = scmp.eq.s32.totalorder %s18, 1
    %p36 = por %p34, %p35
    %p37 = scmp.ne.s32.totalorder %s26, %s27
    %p38 = scmp.eq.s32.totalorder %s18, 0
    %p39 = por %p37, %p38
    %p40 = scmp.ne.s32.totalorder %s26, %s27
    %p41 = scmp.eq.s32.totalorder %s19, 1
    %p42 = por %p40, %p41
    %p44 = scmp.ne.s32.totalorder %s27, %s43
    %p45 = scmp.eq.s32.totalorder %s19, 0
    %p46 = por %p44, %p45
    %s48 = sadd.s32 %s47, 1
    %p51 = scmp.eq.s32.totalorder %s13, 1
    %p52 = scmp.ne.s32.totalorder %s47, %s49
    %p53 = scmp.eq.s32.totalorder %s13, 0
    %p54 = por %p52, %p53
    %p55 = scmp.ne.s32.totalorder %s47, %s49
    %p56 = scmp.eq.s32.totalorder %s18, 1
    %p57 = por %p55, %p56
    %p58 = scmp.ne.s32.totalorder %s49, %s50
    %p59 = scmp.eq.s32.totalorder %s18, 0
    %p60 = por %p58, %p59
    %p61 = scmp.ne.s32.totalorder %s49, %s50
    %p62 = scmp.eq.s32.totalorder %s19, 1
    %p63 = por %p61, %p62
    %p65 = scmp.ne.s32.totalorder %s50, %s64
    %p66 = scmp.eq.s32.totalorder %s19, 0
    %p67 = por %p65, %p66
    %s69 = sadd.s32 %s68, 1
    %p72 = scmp.eq.s32.totalorder %s13, 1
    %p73 = scmp.ne.s32.totalorder %s68, %s70
    %p74 = scmp.eq.s32.totalorder %s13, 0
    %p75 = por %p73, %p74
    %p76 = scmp.ne.s32.totalorder %s68, %s70
    %p77 = scmp.eq.s32.totalorder %s18, 1
    %p78 = por %p76, %p77
    %p79 = scmp.ne.s32.totalorder %s70, %s71
    %p80 = scmp.eq.s32.totalorder %s18, 0
    %p81 = por %p79, %p80
    %p82 = scmp.ne.s32.totalorder %s70, %s71
    %p83 = scmp.eq.s32.totalorder %s19, 1
    %p84 = por %p82, %p83
    %p86 = scmp.ne.s32.totalorder %s71, %s85
    %p87 = scmp.eq.s32.totalorder %s19, 0
    %p88 = por %p86, %p87
    %s90 = sadd.s32 %s89, 1
    %p93 = scmp.eq.s32.totalorder %s13, 1
    %p94 = scmp.ne.s32.totalorder %s89, %s91
    %p95 = scmp.eq.s32.totalorder %s13, 0
    %p96 = por %p94, %p95
    %p97 = scmp.ne.s32.totalorder %s89, %s91
    %p98 = scmp.eq.s32.totalorder %s18, 1
    %p99 = por %p97, %p98
    %p100 = scmp.ne.s32.totalorder %s91, %s92
    %p101 = scmp.eq.s32.totalorder %s18, 0
    %p102 = por %p100, %p101
    %p103 = scmp.ne.s32.totalorder %s91, %s92
    %p104 = scmp.eq.s32.totalorder %s19, 1
    %p105 = por %p103, %p104
    %p107 = scmp.ne.s32.totalorder %s92, %s106
    %p108 = scmp.eq.s32.totalorder %s19, 0
    %p109 = por %p107, %p108
    %s111 = sadd.s32 %s110, 1
    %p114 = scmp.eq.s32.totalorder %s13, 1
    %p115 = scmp.ne.s32.totalorder %s110, %s112
    %p116 = scmp.eq.s32.totalorder %s13, 0
    %p117 = por %p115, %p116
    %p118 = scmp.ne.s32.totalorder %s110, %s112
    %p119 = scmp.eq.s32.totalorder %s18, 1
    %p120 = por %p118, %p119
    %p121 = scmp.ne.s32.totalorder %s112, %s113
    %p122 = scmp.eq.s32.totalorder %s18, 0
    %p123 = por %p121, %p122
    %p124 = scmp.ne.s32.totalorder %s112, %s113
    %p125 = scmp.eq.s32.totalorder %s19, 1
    %p126 = por %p124, %p125
    %p128 = scmp.ne.s32.totalorder %s113, %s127
    %p129 = scmp.eq.s32.totalorder %s19, 0
    %p130 = por %p128, %p129
    %s132 = sadd.s32 %s131, 1
    %p135 = scmp.eq.s32.totalorder %s13, 1
    %p136 = scmp.ne.s32.totalorder %s131, %s133
    %p137 = scmp.eq.s32.totalorder %s13, 0
    %p138 = por %p136, %p137
    %p139 = scmp.ne.s32.totalorder %s131, %s133
    %p140 = scmp.eq.s32.totalorder %s18, 1
    %p141 = por %p139, %p140
    %p142 = scmp.ne.s32.totalorder %s133, %s134
    %p143 = scmp.eq.s32.totalorder %s18, 0
    %p144 = por %p142, %p143
    %p145 = scmp.ne.s32.totalorder %s133, %s134
    %p146 = scmp.eq.s32.totalorder %s19, 1
    %p147 = por %p145, %p146
    %p149 = scmp.ne.s32.totalorder %s134, %s148
    %p150 = scmp.eq.s32.totalorder %s19, 0
    %p151 = por %p149, %p150
    %s153 = sadd.s32 %s152, 1
    %p156 = scmp.eq.s32.totalorder %s13, 1
    %p157 = scmp.ne.s32.totalorder %s152, %s154
    %p158 = scmp.eq.s32.totalorder %s13, 0
    %p159 = por %p157, %p158
    %p160 = scmp.ne.s32.totalorder %s152, %s154
    %p161 = scmp.eq.s32.totalorder %s18, 1
    %p162 = por %p160, %p161
    %p163 = scmp.ne.s32.totalorder %s154, %s155
    %p164 = scmp.eq.s32.totalorder %s18, 0
    %p165 = por %p163, %p164
    %p166 = scmp.ne.s32.totalorder %s154, %s155
    %p167 = scmp.eq.s32.totalorder %s19, 1
    %p168 = por %p166, %p167
    %p170 = scmp.ne.s32.totalorder %s155, %s169
    %p171 = scmp.eq.s32.totalorder %s19, 0
    %p172 = por %p170, %p171
    %s173 = ssub.s32 %s13, %s20
    %p174 = scmp.eq.s32.totalorder %s173, 0
    %s176 = sadd.s32 %s175, 1
    %s177 = scalar_select %p174, %s175, %s176
    %p180 = pneg %p174
    %p181 = scmp.eq.s32.totalorder %s13, 1
    %p182 = por %p180, %p181
    %p183 = scmp.ne.s32.totalorder %s175, %s178
    %p184 = scmp.eq.s32.totalorder %s13, 0
    %p185 = por %p183, %p184
    %p186 = scmp.ne.s32.totalorder %s175, %s178
    %p187 = scmp.eq.s32.totalorder %s18, 1
    %p188 = por %p186, %p187
    %p189 = scmp.ne.s32.totalorder %s178, %s179
    %p190 = scmp.eq.s32.totalorder %s18, 0
    %p191 = por %p189, %p190
    %p192 = scmp.ne.s32.totalorder %s178, %s179
    %p193 = scmp.eq.s32.totalorder %s19, 1
    %p194 = por %p192, %p193
    %p196 = scmp.ne.s32.totalorder %s179, %s195
    %p197 = scmp.eq.s32.totalorder %s19, 0
    %p198 = por %p196, %p197
    %p199 = scmp.le.s32.totalorder 1, %s13
    %p200 = scmp.lt.s32.totalorder %s13, 3
    %p201 = pnand %p199, %p200
    %p202 = pneg %p201
    // Predicated region
    $region9: #{rnd_forward.1} parent=5 // pred_check
      _
    $region10: #{rnd_forward.1} parent=5 // pred_check_branch
      %204 = sbr.rel (%p201) target = $region12
    $region11: #{rnd_forward.1} parent=5 // pred_region
      %s205 = ssub.s32 %s13, 1
      // Predicated region
      $region13: #{rnd_forward.1} parent=11 // pred_check
        %p206 = pneg %p60
      $region14: #{rnd_forward.1} parent=11 // pred_check_branch
        %208 = sbr.rel (%p206) target = $region16
      $region15: #{rnd_forward.1} parent=11 // pred_region
        _
      $region16: #{rnd_forward.1} parent=11 // pred_fallthru
        _
      // Predicated region
      $region17: #{rnd_forward.1} parent=11 // pred_check
        %p209 = pneg %p81
      $region18: #{rnd_forward.1} parent=11 // pred_check_branch
        %211 = sbr.rel (%p209) target = $region20
      $region19: #{rnd_forward.1} parent=11 // pred_region
        _
      $region20: #{rnd_forward.1} parent=11 // pred_fallthru
        _
      // Predicated region
      $region21: #{rnd_forward.1} parent=11 // pred_check
        %p212 = pneg %p102
      $region22: #{rnd_forward.1} parent=11 // pred_check_branch
        %214 = sbr.rel (%p212) target = $region24
      $region23: #{rnd_forward.1} parent=11 // pred_region
        _
      $region24: #{rnd_forward.1} parent=11 // pred_fallthru
        _
      // Predicated region
      $region25: #{rnd_forward.1} parent=11 // pred_check
        %p215 = pneg %p123
      $region26: #{rnd_forward.1} parent=11 // pred_check_branch
        %217 = sbr.rel (%p215) target = $region28
      $region27: #{rnd_forward.1} parent=11 // pred_region
        _
      $region28: #{rnd_forward.1} parent=11 // pred_fallthru
        _
      // Predicated region
      $region29: #{rnd_forward.1} parent=11 // pred_check
        %p218 = pneg %p144
      $region30: #{rnd_forward.1} parent=11 // pred_check_branch
        %220 = sbr.rel (%p218) target = $region32
      $region31: #{rnd_forward.1} parent=11 // pred_region
        _
      $region32: #{rnd_forward.1} parent=11 // pred_fallthru
        _
      // Predicated region
      $region33: #{rnd_forward.1} parent=11 // pred_check
        %p221 = pneg %p165
      $region34: #{rnd_forward.1} parent=11 // pred_check_branch
        %223 = sbr.rel (%p221) target = $region36
      $region35: #{rnd_forward.1} parent=11 // pred_region
        _
      $region36: #{rnd_forward.1} parent=11 // pred_fallthru
        _
    $region12: #{rnd_forward.1} parent=5 // pred_fallthru
      _
    %p224 = scmp.lt.s32.totalorder %s13, 2
    // Predicated region
    $region37: #{rnd_forward.1} parent=5 // pred_check
      %p225 = pneg %p224
    $region38: #{rnd_forward.1} parent=5 // pred_check_branch
      %227 = sbr.rel (%p225) target = $region40
    $region39: #{rnd_forward.1} parent=5 // pred_region
      // Predicated region
      $region41: #{rnd_forward.1} parent=39 // pred_check
        %p228 = pneg %p33
      $region42: #{rnd_forward.1} parent=39 // pred_check_branch
        %230 = sbr.rel (%p228) target = $region44
      $region43: #{rnd_forward.1} parent=39 // pred_region
        %s231 = smul.u32 32, %s13
        %s232 = ssub.s32 38, %s231
        %p233 = scmp.lt.s32.totalorder %s232, 32
        %s234 = scalar_select %p233, %s232, 32
        %s235 = smul.u32 8, %s234
        %p236 = scmp.lt.s32.totalorder %s231, 37
        %s237 = scalar_select %p236, %s231, 37
        %s238 = smul.addr %s237, 8
        %s239 = scalar_lea.vmem %s0, %s238
        %s240 = smul.u32 32, %s13
        %s241 = ssub.s32 38, %s240
        %p242 = scmp.lt.s32.totalorder %s241, 32
        %s243 = scalar_select %p242, %s241, 32
        %s244 = smul.u32 8, %s243
      $region44: #{rnd_forward.1} parent=39 // pred_fallthru
        _
    $region40: #{rnd_forward.1} parent=5 // pred_fallthru
      _
    %p245 = scmp.le.s32.totalorder 1, %s13
    %p246 = scmp.lt.s32.totalorder %s13, 3
    %p247 = pnand %p245, %p246
    %p248 = pneg %p247
    // Predicated region
    $region45: #{rnd_forward.1} parent=5 // pred_check
      _
    $region46: #{rnd_forward.1} parent=5 // pred_check_branch
      %250 = sbr.rel (%p247) target = $region48
    $region47: #{rnd_forward.1} parent=5 // pred_region
      %s251 = ssub.s32 %s13, 1
      %s252 = smul.u32 32, %s18
      %s253 = ssub.s32 38, %s252
      %p254 = scmp.lt.s32.totalorder %s253, 32
      %s255 = scalar_select %p254, %s253, 32
      %s256 = smul.u32 8, %s255
      %p257 = scmp.lt.s32.totalorder %s252, 37
      %s258 = scalar_select %p257, %s252, 37
      %s259 = smul.addr %s258, 8
      %s260 = scalar_lea.vmem %s0, %s259
      %p261 = pneg %p39
      %p262 = pneg %p36
      %p263 = pneg %p60
      %p264 = pneg %p57
      %p265 = pneg %p81
      %p266 = pneg %p78
      %p267 = pneg %p102
      %p268 = pneg %p99
      %p269 = pneg %p123
      %p270 = pneg %p120
      %p271 = pneg %p144
      %p272 = pneg %p141
      %p273 = pneg %p165
      %p274 = pneg %p162
      %p275 = pneg %p191
      %p276 = pneg %p188
      %s277 = smul.u32 2, %s18
      %p278 = scmp.lt.s32.totalorder %s277, 3
      %s279 = scalar_select %p278, %s277, 3
      %s280 = scalar_lea.vmem %s7, %s279
      %s281 = smul.u32 32, %s18
      %s282 = ssub.s32 38, %s281
      %p283 = scmp.lt.s32.totalorder %s282, 32
      %s284 = scalar_select %p283, %s282, 32
      %s285 = smul.u32 8, %s284
      %p286 = scmp.lt.s32.totalorder %s281, 37
      %s287 = scalar_select %p286, %s281, 37
      %s288 = smul.addr %s287, 8
      %s289 = scalar_lea.vmem %s0, %s288
      %s290 = smul.u32 32, %s18
      %s291 = ssub.s32 38, %s290
      %p292 = scmp.lt.s32.totalorder %s291, 32
      %s293 = scalar_select %p292, %s291, 32
      %s294 = smul.u32 8, %s293
      %s295 = smul.u32 2, %s18
      %p296 = scmp.lt.s32.totalorder %s295, 3
      %s297 = scalar_select %p296, %s295, 3
      %s298 = scalar_lea.vmem %s7, %s297
      %s299 = smul.u32 2, %s18
      %v300 = vld [vmem:[%s289] sm:$0xff]
      %v301 = vld [vmem:[%s289 + $0x8] sm:$0xff]
      %v302 = vld [vmem:[%s289 + $0x10] sm:$0xff]
      %v303 = vld [vmem:[%s289 + $0x18] sm:$0xff]
      %v304 = vld [vmem:[%s289 + $0x20] sm:$0xff]
      %v305 = vld [vmem:[%s289 + $0x28] sm:$0xff]
      %v306 = vld [vmem:[%s289 + $0x30] sm:$0xff]
      %v307 = vld [vmem:[%s289 + $0x38] sm:$0xff]
      %v308 = vld [vmem:[%s289 + $0x40] sm:$0xff]
      %v309 = vld [vmem:[%s289 + $0x48] sm:$0xff]
      %v310 = vld [vmem:[%s289 + $0x50] sm:$0xff]
      %v311 = vld [vmem:[%s289 + $0x58] sm:$0xff]
      %v312 = vld [vmem:[%s289 + $0x60] sm:$0xff]
      %v313 = vld [vmem:[%s289 + $0x68] sm:$0xff]
      %v314 = vld [vmem:[%s289 + $0x70] sm:$0xff]
      %v315 = vld [vmem:[%s289 + $0x78] sm:$0xff]
      %v316 = vld [vmem:[%s289 + $0x80] sm:$0xff]
      %v317 = vld [vmem:[%s289 + $0x88] sm:$0xff]
      %v318 = vld [vmem:[%s289 + $0x90] sm:$0xff]
      %v319 = vld [vmem:[%s289 + $0x98] sm:$0xff]
      %v320 = vld [vmem:[%s289 + $0xa0] sm:$0xff]
      %v321 = vld [vmem:[%s289 + $0xa8] sm:$0xff]
      %v322 = vld [vmem:[%s289 + $0xb0] sm:$0xff]
      %v323 = vld [vmem:[%s289 + $0xb8] sm:$0xff]
      %v324 = vld [vmem:[%s289 + $0xc0] sm:$0xff]
      %v325 = vld [vmem:[%s289 + $0xc8] sm:$0xff]
      %v326 = vld [vmem:[%s289 + $0xd0] sm:$0xff]
      %v327 = vld [vmem:[%s289 + $0xd8] sm:$0xff]
      %v328 = vld [vmem:[%s289 + $0xe0] sm:$0xff]
      %v329 = vld [vmem:[%s289 + $0xe8] sm:$0xff]
      %v330 = vld [vmem:[%s289 + $0xf0] sm:$0xff]
      %v331 = vld [vmem:[%s289 + $0xf8] sm:$0xff]
      %v332 = vld [vmem:[%s1] sm:$0xff]
      %v333 = vld [vmem:[%s1 + $0x8] sm:$0xff]
      %v334 = vld [vmem:[%s1 + $0x10] sm:$0xff]
      %v335 = vld [vmem:[%s1 + $0x18] sm:$0xff]
      %v336 = vld [vmem:[%s1 + $0x20] sm:$0xff]
      %v337 = vld [vmem:[%s1 + $0x28] sm:$0xff]
      %v338 = vld [vmem:[%s1 + $0x30] sm:$0xff]
      %v339 = vld [vmem:[%s1 + $0x38] sm:$0xff]
      %v340 = vld [vmem:[%s2] sm:$0xff]
      %v341 = vld [vmem:[%s2 + $0x8] sm:$0xff]
      %v342 = vld [vmem:[%s2 + $0x10] sm:$0xff]
      %v343 = vld [vmem:[%s2 + $0x18] sm:$0xff]
      %v344 = vld [vmem:[%s2 + $0x20] sm:$0xff]
      %v345 = vld [vmem:[%s2 + $0x28] sm:$0xff]
      %v346 = vld [vmem:[%s2 + $0x30] sm:$0xff]
      %v347 = vld [vmem:[%s2 + $0x38] sm:$0xff]
      %349 = vset.pattern.permute.xlu0 0
      %350 = vperm.xlu0 %349, %v340
      %v351 = vpop.permute.xlu0 %350
      %354 = vset.pattern.permute.xlu0 0
      %355 = vperm.xlu0 %354, %v341
      %v356 = vpop.permute.xlu0 %355
      %359 = vset.pattern.permute.xlu0 0
      %360 = vperm.xlu0 %359, %v342
      %v361 = vpop.permute.xlu0 %360
      %364 = vset.pattern.permute.xlu0 0
      %365 = vperm.xlu0 %364, %v343
      %v366 = vpop.permute.xlu0 %365
      %369 = vset.pattern.permute.xlu0 0
      %370 = vperm.xlu0 %369, %v344
      %v371 = vpop.permute.xlu0 %370
      %374 = vset.pattern.permute.xlu0 0
      %375 = vperm.xlu0 %374, %v345
      %v376 = vpop.permute.xlu0 %375
      %379 = vset.pattern.permute.xlu0 0
      %380 = vperm.xlu0 %379, %v346
      %v381 = vpop.permute.xlu0 %380
      %384 = vset.pattern.permute.xlu0 0
      %385 = vperm.xlu0 %384, %v347
      %v386 = vpop.permute.xlu0 %385
      %vm388 = vcmask 130048
      %v390 = vsel %vm388, %v332, 0
      %v393 = vsel %vm388, %v333, 0
      %v396 = vsel %vm388, %v334, 0
      %v399 = vsel %vm388, %v335, 0
      %v402 = vsel %vm388, %v336, 0
      %v405 = vsel %vm388, %v337, 0
      %v408 = vsel %vm388, %v338, 0
      %v411 = vsel %vm388, %v339, 0
      %v414 = vsel %vm388, %v300, 0
      %v417 = vsel %vm388, %v301, 0
      %v420 = vsel %vm388, %v302, 0
      %v423 = vsel %vm388, %v303, 0
      %v426 = vsel %vm388, %v304, 0
      %v429 = vsel %vm388, %v305, 0
      %v432 = vsel %vm388, %v306, 0
      %v435 = vsel %vm388, %v307, 0
      %v438 = vsel %vm388, %v308, 0
      %v441 = vsel %vm388, %v309, 0
      %v444 = vsel %vm388, %v310, 0
      %v447 = vsel %vm388, %v311, 0
      %v450 = vsel %vm388, %v312, 0
      %v453 = vsel %vm388, %v313, 0
      %v456 = vsel %vm388, %v314, 0
      %v459 = vsel %vm388, %v315, 0
      %v462 = vsel %vm388, %v316, 0
      %v465 = vsel %vm388, %v317, 0
      %v468 = vsel %vm388, %v318, 0
      %v471 = vsel %vm388, %v319, 0
      %v474 = vsel %vm388, %v320, 0
      %v477 = vsel %vm388, %v321, 0
      %v480 = vsel %vm388, %v322, 0
      %v483 = vsel %vm388, %v323, 0
      %v486 = vsel %vm388, %v324, 0
      %v489 = vsel %vm388, %v325, 0
      %v492 = vsel %vm388, %v326, 0
      %v495 = vsel %vm388, %v327, 0
      %v498 = vsel %vm388, %v328, 0
      %v501 = vsel %vm388, %v329, 0
      %v504 = vsel %vm388, %v330, 0
      %v507 = vsel %vm388, %v331, 0
      %509 = vmatpush.xpose.msra.mxu0 %v459
      %510 = vmatpush.xpose.msra.mxu0 %v456
      %511 = vmatpush.xpose.msra.mxu0 %v453
      %512 = vmatpush.xpose.msra.mxu0 %v450
      %513 = vmatpush.xpose.msra.mxu0 %v447
      %514 = vmatpush.xpose.msra.mxu0 %v444
      %515 = vmatpush.xpose.msra.mxu0 %v441
      %516 = vmatpush.xpose.msra.mxu0 %v438
      %517 = vmatpush.xpose.msra.mxu0 %v435
      %518 = vmatpush.xpose.msra.mxu0 %v432
      %519 = vmatpush.xpose.msra.mxu0 %v429
      %520 = vmatpush.xpose.msra.mxu0 %v426
      %521 = vmatpush.xpose.msra.mxu0 %v423
      %522 = vmatpush.xpose.msra.mxu0 %v420
      %523 = vmatpush.xpose.msra.mxu0 %v417
      %524 = vmatpush.xpose.msra.mxu0 %v414
      %525 = vmatmul.f32.gmra.mxu0 %v390
      %v526 = vpop.f32.mrf.mxu0
      %v527 = vadd.f32 %v351, %v526
      %528 = vmatmul.f32.gmra.mxu0 %v393
      %v529 = vpop.f32.mrf.mxu0
      %v530 = vadd.f32 %v356, %v529
      %531 = vmatmul.f32.gmra.mxu0 %v396
      %v532 = vpop.f32.mrf.mxu0
      %v533 = vadd.f32 %v361, %v532
      %534 = vmatmul.f32.gmra.mxu0 %v399
      %v535 = vpop.f32.mrf.mxu0
      %v536 = vadd.f32 %v366, %v535
      %537 = vmatmul.f32.gmra.mxu0 %v402
      %v538 = vpop.f32.mrf.mxu0
      %v539 = vadd.f32 %v371, %v538
      %540 = vmatmul.f32.gmra.mxu0 %v405
      %v541 = vpop.f32.mrf.mxu0
      %v542 = vadd.f32 %v376, %v541
      %543 = vmatmul.f32.gmra.mxu0 %v408
      %v544 = vpop.f32.mrf.mxu0
      %v545 = vadd.f32 %v381, %v544
      %546 = vmatmul.f32.gmra.mxu0 %v411
      %v547 = vpop.f32.mrf.mxu0
      %v548 = vadd.f32 %v386, %v547
      %549 = vdwg.mxu0
      %550 = vmatpush.xpose.msra.mxu0 %v507
      %551 = vmatpush.xpose.msra.mxu0 %v504
      %552 = vmatpush.xpose.msra.mxu0 %v501
      %553 = vmatpush.xpose.msra.mxu0 %v498
      %554 = vmatpush.xpose.msra.mxu0 %v495
      %555 = vmatpush.xpose.msra.mxu0 %v492
      %556 = vmatpush.xpose.msra.mxu0 %v489
      %557 = vmatpush.xpose.msra.mxu0 %v486
      %558 = vmatpush.xpose.msra.mxu0 %v483
      %559 = vmatpush.xpose.msra.mxu0 %v480
      %560 = vmatpush.xpose.msra.mxu0 %v477
      %561 = vmatpush.xpose.msra.mxu0 %v474
      %562 = vmatpush.xpose.msra.mxu0 %v471
      %563 = vmatpush.xpose.msra.mxu0 %v468
      %564 = vmatpush.xpose.msra.mxu0 %v465
      %565 = vmatpush.xpose.msra.mxu0 %v462
      %566 = vmatmul.f32.gmra.mxu0 %v390
      %v567 = vpop.f32.mrf.mxu0
      %v568 = vadd.f32 %v351, %v567
      %569 = vmatmul.f32.gmra.mxu0 %v393
      %v570 = vpop.f32.mrf.mxu0
      %v571 = vadd.f32 %v356, %v570
      %572 = vmatmul.f32.gmra.mxu0 %v396
      %v573 = vpop.f32.mrf.mxu0
      %v574 = vadd.f32 %v361, %v573
      %575 = vmatmul.f32.gmra.mxu0 %v399
      %v576 = vpop.f32.mrf.mxu0
      %v577 = vadd.f32 %v366, %v576
      %578 = vmatmul.f32.gmra.mxu0 %v402
      %v579 = vpop.f32.mrf.mxu0
      %v580 = vadd.f32 %v371, %v579
      %581 = vmatmul.f32.gmra.mxu0 %v405
      %v582 = vpop.f32.mrf.mxu0
      %v583 = vadd.f32 %v376, %v582
      %584 = vmatmul.f32.gmra.mxu0 %v408
      %v585 = vpop.f32.mrf.mxu0
      %v586 = vadd.f32 %v381, %v585
      %587 = vmatmul.f32.gmra.mxu0 %v411
      %v588 = vpop.f32.mrf.mxu0
      %v589 = vadd.f32 %v386, %v588
      %590 = vdwg.mxu0
      %v591 = vtanh.pop %v527
      %v592 = vtanh.pop %v568
      %v593 = vtanh.pop %v530
      %v594 = vtanh.pop %v571
      %v595 = vtanh.pop %v533
      %v596 = vtanh.pop %v574
      %v597 = vtanh.pop %v536
      %v598 = vtanh.pop %v577
      %v599 = vtanh.pop %v539
      %v600 = vtanh.pop %v580
      %v601 = vtanh.pop %v542
      %v602 = vtanh.pop %v583
      %v603 = vtanh.pop %v545
      %v604 = vtanh.pop %v586
      %v605 = vtanh.pop %v548
      %v606 = vtanh.pop %v589
      %v607 = vld [vmem:[%s3] sm:$0xff]
      %v608 = vld [vmem:[%s3 + $0x8] sm:$0xff]
      %v609 = vld [vmem:[%s3 + $0x10] sm:$0xff]
      %v610 = vld [vmem:[%s3 + $0x18] sm:$0xff]
      %v611 = vld [vmem:[%s3 + $0x20] sm:$0xff]
      %v612 = vld [vmem:[%s3 + $0x28] sm:$0xff]
      %v613 = vld [vmem:[%s3 + $0x30] sm:$0xff]
      %v614 = vld [vmem:[%s3 + $0x38] sm:$0xff]
      %v615 = vld [vmem:[%s4] sm:$0xff]
      %v616 = vld [vmem:[%s4 + $0x8] sm:$0xff]
      %v617 = vld [vmem:[%s4 + $0x10] sm:$0xff]
      %v618 = vld [vmem:[%s4 + $0x18] sm:$0xff]
      %v619 = vld [vmem:[%s4 + $0x20] sm:$0xff]
      %v620 = vld [vmem:[%s4 + $0x28] sm:$0xff]
      %v621 = vld [vmem:[%s4 + $0x30] sm:$0xff]
      %v622 = vld [vmem:[%s4 + $0x38] sm:$0xff]
      %624 = vset.pattern.permute.xlu0 0
      %625 = vperm.xlu0 %624, %v615
      %v626 = vpop.permute.xlu0 %625
      %629 = vset.pattern.permute.xlu0 0
      %630 = vperm.xlu0 %629, %v616
      %v631 = vpop.permute.xlu0 %630
      %634 = vset.pattern.permute.xlu0 0
      %635 = vperm.xlu0 %634, %v617
      %v636 = vpop.permute.xlu0 %635
      %639 = vset.pattern.permute.xlu0 0
      %640 = vperm.xlu0 %639, %v618
      %v641 = vpop.permute.xlu0 %640
      %644 = vset.pattern.permute.xlu0 0
      %645 = vperm.xlu0 %644, %v619
      %v646 = vpop.permute.xlu0 %645
      %649 = vset.pattern.permute.xlu0 0
      %650 = vperm.xlu0 %649, %v620
      %v651 = vpop.permute.xlu0 %650
      %654 = vset.pattern.permute.xlu0 0
      %655 = vperm.xlu0 %654, %v621
      %v656 = vpop.permute.xlu0 %655
      %659 = vset.pattern.permute.xlu0 0
      %660 = vperm.xlu0 %659, %v622
      %v661 = vpop.permute.xlu0 %660
      %vm663 = vcmask 523264
      %v665 = vsel %vm663, %v607, 0
      %v668 = vsel %vm663, %v608, 0
      %v671 = vsel %vm663, %v609, 0
      %v674 = vsel %vm663, %v610, 0
      %v677 = vsel %vm663, %v611, 0
      %v680 = vsel %vm663, %v612, 0
      %v683 = vsel %vm663, %v613, 0
      %v686 = vsel %vm663, %v614, 0
      %688 = vmatpush.msra.mxu0 0.0
      %689 = vmatpush.msra.mxu0 0.0
      %690 = vmatpush.msra.mxu0 0.0
      %691 = vmatpush.msra.mxu0 0.0
      %692 = vmatpush.msra.mxu0 0.0
      %693 = vmatpush.msra.mxu0 0.0
      %694 = vmatpush.msra.mxu0 0.0
      %695 = vmatpush.msra.mxu0 0.0
      %696 = vmatpush.msra.mxu0 %v605
      %697 = vmatpush.msra.mxu0 %v603
      %698 = vmatpush.msra.mxu0 %v601
      %699 = vmatpush.msra.mxu0 %v599
      %700 = vmatpush.msra.mxu0 %v597
      %701 = vmatpush.msra.mxu0 %v595
      %702 = vmatpush.msra.mxu0 %v593
      %703 = vmatpush.msra.mxu0 %v591
      %704 = vmatmul.f32.gmra.mxu0 %v665
      %v705 = vpop.f32.mrf.mxu0
      %v706 = vadd.f32 %v626, %v705
      %707 = vmatmul.f32.gmra.mxu0 %v668
      %v708 = vpop.f32.mrf.mxu0
      %v709 = vadd.f32 %v631, %v708
      %710 = vmatmul.f32.gmra.mxu0 %v671
      %v711 = vpop.f32.mrf.mxu0
      %v712 = vadd.f32 %v636, %v711
      %713 = vmatmul.f32.gmra.mxu0 %v674
      %v714 = vpop.f32.mrf.mxu0
      %v715 = vadd.f32 %v641, %v714
      %716 = vmatmul.f32.gmra.mxu0 %v677
      %v717 = vpop.f32.mrf.mxu0
      %v718 = vadd.f32 %v646, %v717
      %719 = vmatmul.f32.gmra.mxu0 %v680
      %v720 = vpop.f32.mrf.mxu0
      %v721 = vadd.f32 %v651, %v720
      %722 = vmatmul.f32.gmra.mxu0 %v683
      %v723 = vpop.f32.mrf.mxu0
      %v724 = vadd.f32 %v656, %v723
      %725 = vmatmul.f32.gmra.mxu0 %v686
      %v726 = vpop.f32.mrf.mxu0
      %v727 = vadd.f32 %v661, %v726
      %728 = vdwg.mxu0
      %729 = vmatpush.msra.mxu0 0.0
      %730 = vmatpush.msra.mxu0 0.0
      %731 = vmatpush.msra.mxu0 0.0
      %732 = vmatpush.msra.mxu0 0.0
      %733 = vmatpush.msra.mxu0 0.0
      %734 = vmatpush.msra.mxu0 0.0
      %735 = vmatpush.msra.mxu0 0.0
      %736 = vmatpush.msra.mxu0 0.0
      %737 = vmatpush.msra.mxu0 %v606
      %738 = vmatpush.msra.mxu0 %v604
      %739 = vmatpush.msra.mxu0 %v602
      %740 = vmatpush.msra.mxu0 %v600
      %741 = vmatpush.msra.mxu0 %v598
      %742 = vmatpush.msra.mxu0 %v596
      %743 = vmatpush.msra.mxu0 %v594
      %744 = vmatpush.msra.mxu0 %v592
      %745 = vmatmul.f32.gmra.mxu0 %v665
      %v746 = vpop.f32.mrf.mxu0
      %v747 = vadd.f32 %v626, %v746
      %748 = vmatmul.f32.gmra.mxu0 %v668
      %v749 = vpop.f32.mrf.mxu0
      %v750 = vadd.f32 %v631, %v749
      %751 = vmatmul.f32.gmra.mxu0 %v671
      %v752 = vpop.f32.mrf.mxu0
      %v753 = vadd.f32 %v636, %v752
      %754 = vmatmul.f32.gmra.mxu0 %v674
      %v755 = vpop.f32.mrf.mxu0
      %v756 = vadd.f32 %v641, %v755
      %757 = vmatmul.f32.gmra.mxu0 %v677
      %v758 = vpop.f32.mrf.mxu0
      %v759 = vadd.f32 %v646, %v758
      %760 = vmatmul.f32.gmra.mxu0 %v680
      %v761 = vpop.f32.mrf.mxu0
      %v762 = vadd.f32 %v651, %v761
      %763 = vmatmul.f32.gmra.mxu0 %v683
      %v764 = vpop.f32.mrf.mxu0
      %v765 = vadd.f32 %v656, %v764
      %766 = vmatmul.f32.gmra.mxu0 %v686
      %v767 = vpop.f32.mrf.mxu0
      %v768 = vadd.f32 %v661, %v767
      %769 = vdwg.mxu0
      %v770 = vtanh.pop %v706
      %v771 = vtanh.pop %v747
      %v772 = vtanh.pop %v709
      %v773 = vtanh.pop %v750
      %v774 = vtanh.pop %v712
      %v775 = vtanh.pop %v753
      %v776 = vtanh.pop %v715
      %v777 = vtanh.pop %v756
      %v778 = vtanh.pop %v718
      %v779 = vtanh.pop %v759
      %v780 = vtanh.pop %v721
      %v781 = vtanh.pop %v762
      %v782 = vtanh.pop %v724
      %v783 = vtanh.pop %v765
      %v784 = vtanh.pop %v727
      %v785 = vtanh.pop %v768
      %v786 = vld [vmem:[%s5] sm:$0xff]
      %v787 = vld [vmem:[%s5 + $0x8] sm:$0xff]
      %v788 = vld [vmem:[%s6] sm:$0xff]
      %v789 = vld [vmem:[%s6 + $0x8] sm:$0xff]
      %791 = vset.pattern.permute.xlu0 0
      %792 = vperm.xlu0 %791, %v788
      %v793 = vpop.permute.xlu0 %792
      %796 = vset.pattern.permute.xlu0 0
      %797 = vperm.xlu0 %796, %v789
      %v798 = vpop.permute.xlu0 %797
      %v801 = vsel %vm663, %v786, 0
      %v804 = vsel %vm663, %v787, 0
      %806 = vmatpush.msra.mxu0 0.0
      %807 = vmatpush.msra.mxu0 0.0
      %808 = vmatpush.msra.mxu0 0.0
      %809 = vmatpush.msra.mxu0 0.0
      %810 = vmatpush.msra.mxu0 0.0
      %811 = vmatpush.msra.mxu0 0.0
      %812 = vmatpush.msra.mxu0 0.0
      %813 = vmatpush.msra.mxu0 0.0
      %814 = vmatpush.msra.mxu0 %v784
      %815 = vmatpush.msra.mxu0 %v782
      %816 = vmatpush.msra.mxu0 %v780
      %817 = vmatpush.msra.mxu0 %v778
      %818 = vmatpush.msra.mxu0 %v776
      %819 = vmatpush.msra.mxu0 %v774
      %820 = vmatpush.msra.mxu0 %v772
      %821 = vmatpush.msra.mxu0 %v770
      %822 = vmatmul.f32.gmra.mxu0 %v801
      %v823 = vpop.f32.mrf.mxu0
      %v824 = vadd.f32 %v793, %v823
      %825 = vmatmul.f32.gmra.mxu0 %v804
      %v826 = vpop.f32.mrf.mxu0
      %v827 = vadd.f32 %v798, %v826
      %828 = vdwg.mxu0
      %829 = vmatpush.msra.mxu0 0.0
      %830 = vmatpush.msra.mxu0 0.0
      %831 = vmatpush.msra.mxu0 0.0
      %832 = vmatpush.msra.mxu0 0.0
      %833 = vmatpush.msra.mxu0 0.0
      %834 = vmatpush.msra.mxu0 0.0
      %835 = vmatpush.msra.mxu0 0.0
      %836 = vmatpush.msra.mxu0 0.0
      %837 = vmatpush.msra.mxu0 %v785
      %838 = vmatpush.msra.mxu0 %v783
      %839 = vmatpush.msra.mxu0 %v781
      %840 = vmatpush.msra.mxu0 %v779
      %841 = vmatpush.msra.mxu0 %v777
      %842 = vmatpush.msra.mxu0 %v775
      %843 = vmatpush.msra.mxu0 %v773
      %844 = vmatpush.msra.mxu0 %v771
      %845 = vmatmul.f32.gmra.mxu0 %v801
      %v846 = vpop.f32.mrf.mxu0
      %v847 = vadd.f32 %v793, %v846
      %848 = vmatmul.f32.gmra.mxu0 %v804
      %v849 = vpop.f32.mrf.mxu0
      %v850 = vadd.f32 %v798, %v849
      %851 = vdwg.mxu0
      %v852 = vsub.f32 %v827, %v824
      %v853 = vsub.f32 %v850, %v847
      %v854 = vmul.f32 %v852, %v852
      %v855 = vmul.f32 %v853, %v853
      %v856 = vrot.slane %v854, 4
      %v857 = vadd.f32 %v854, %v856
      %v858 = vrot.slane %v857, 2
      %v859 = vadd.f32 %v857, %v858
      %v860 = vrot.slane %v859, 1
      %v861 = vadd.f32 %v859, %v860
      %v862 = vrot.slane %v855, 4
      %v863 = vadd.f32 %v855, %v862
      %v864 = vrot.slane %v863, 2
      %v865 = vadd.f32 %v863, %v864
      %v866 = vrot.slane %v865, 1
      %v867 = vadd.f32 %v865, %v866
      %v868 = vrcp.pop 8.0
      %v869 = vmul.f32 8.0, %v868
      %v870 = vsub.f32 1.0, %v869
      %v871 = vmul.f32 %v868, %v870
      %v872 = vadd.f32 %v868, %v871
      %vm873 = vweird.f32 %v868
      %v874 = vsel %vm873, %v868, %v872
      %v875 = vmul.f32 %v861, %v874
      %v876 = vmul.f32 %v867, %v874
      %v877 = vrsqrt.pop %v875
      %v878 = vmul.f32 %v877, %v875
      %v879 = vmul.f32 %v878, %v877
      %v880 = vmul.f32 0.5, %v879
      %v881 = vsub.f32 1.5, %v880
      %v882 = vmul.f32 %v877, %v881
      %v883 = vmul.f32 %v875, %v882
      %vm884 = vcmp.eq.f32.partialorder %v875, inf
      %v885 = vsel %vm884, %v875, %v883
      %vm886 = vcmp.eq.f32.partialorder %v875, 0.0
      %v887 = vand.u32 %v875, 2147483648
      %v888 = vsel %vm886, %v887, %v885
      %v889 = vrsqrt.pop %v876
      %v890 = vmul.f32 %v889, %v876
      %v891 = vmul.f32 %v890, %v889
      %v892 = vmul.f32 0.5, %v891
      %v893 = vsub.f32 1.5, %v892
      %v894 = vmul.f32 %v889, %v893
      %v895 = vmul.f32 %v876, %v894
      %vm896 = vcmp.eq.f32.partialorder %v876, inf
      %v897 = vsel %vm896, %v876, %v895
      %vm898 = vcmp.eq.f32.partialorder %v876, 0.0
      %v899 = vand.u32 %v876, 2147483648
      %v900 = vsel %vm898, %v899, %v897
      %v903 = vrot.slane %v900, 7
      %vm904 = vcmask 1040384
      %v905 = vsel %vm904, %v888, %v903
      %v907 = vlaneseq
      %vm908 = vcmp.ge.s32.totalorder %v907, 0
      %vm909 = vcmp.lt.s32.totalorder %v907, 256
      %vm910 = vmand %vm908, %vm909
      %911 = vst.msk [vmem:[%s298] sm:$0x3] %vm910, %v905
      %s912 = smul.u32 2, %s18
      %p913 = scmp.lt.s32.totalorder %s912, 3
      %s914 = scalar_select %p913, %s912, 3
      %s915 = scalar_lea.vmem %s7, %s914
      // Predicated region
      $region49: #{rnd_forward.1} parent=47 // pred_check
        %p916 = pneg %p188
      $region50: #{rnd_forward.1} parent=47 // pred_check_branch
        %918 = sbr.rel (%p916) target = $region52
      $region51: #{rnd_forward.1} parent=47 // pred_region
        %s919 = smul.u32 2, %s18
      $region52: #{rnd_forward.1} parent=47 // pred_fallthru
        _
    $region48: #{rnd_forward.1} parent=5 // pred_fallthru
      _
    %p920 = scmp.le.s32.totalorder 2, %s13
    // Predicated region
    $region53: #{rnd_forward.1} parent=5 // pred_check
      %p921 = pneg %p920
    $region54: #{rnd_forward.1} parent=5 // pred_check_branch
      %923 = sbr.rel (%p921) target = $region56
    $region55: #{rnd_forward.1} parent=5 // pred_region
      %s924 = ssub.s32 %s13, 2
      // Predicated region
      $region57: #{rnd_forward.1} parent=55 // pred_check
        %p925 = pneg %p194
      $region58: #{rnd_forward.1} parent=55 // pred_check_branch
        %927 = sbr.rel (%p925) target = $region60
      $region59: #{rnd_forward.1} parent=55 // pred_region
        %s928 = smul.u32 2, %s19
        %p929 = scmp.lt.s32.totalorder %s928, 3
        %s930 = scalar_select %p929, %s928, 3
        %s931 = scalar_lea.vmem %s7, %s930
      $region60: #{rnd_forward.1} parent=55 // pred_fallthru
        _
    $region56: #{rnd_forward.1} parent=5 // pred_fallthru
      _
  $region6: #{rnd_forward.1} parent=0 // loop_footer
    %s17 = sadd.s32 1, %s13
  $region7: #{rnd_forward.1} parent=0 // loop_footer_branch
    %12 = sbr.rel target = $region3
  $region8: #{rnd_forward.1} parent=0 // loop_exit
    _

</llo_original>
